<compile_context>
chip_gen: v6e
topology: v6e:2x2x1
jax: 0.10.0
libtpu: 0.0.40
codegen_flags: <defaults>
</compile_context>

<pallas_src>
import functools

import jax
import jax.numpy as jnp
from jax.experimental import pallas as pl
from jax.experimental.pallas import tpu as pltpu

HIDDEN = 256
LANE = 128          # pad obs_dim / act_dim up to this (minimum MXU lane granularity)
MAX_TB = 1024       # batch-tile cap (safe for v5e's 16 MiB scoped VMEM default)
COMPUTE_DTYPE = jnp.bfloat16


def _round_up(x, m):
    return ((x + m - 1) // m) * m


def _actor_kernel(act_limit):
    """Returns a Pallas kernel closure with the act_limit constant baked in."""

    def kernel(obs_ref, w1_ref, b1_ref, w2_ref, b2_ref, w3_ref, b3_ref, out_ref):
        # Hidden layer 1: Linear + ReLU  (bf16 inputs, f32 accumulation)
        x = jnp.dot(obs_ref[...], w1_ref[...], preferred_element_type=jnp.float32)
        x = jnp.maximum(x + b1_ref[...], 0.0)
        # Hidden layer 2: Linear + ReLU
        x = jnp.dot(x.astype(w2_ref.dtype), w2_ref[...],
                    preferred_element_type=jnp.float32)
        x = jnp.maximum(x + b2_ref[...], 0.0)
        # mu layer: Linear, then tanh * act_limit (tanh runs on the EUP)
        mu = jnp.dot(x.astype(w3_ref.dtype), w3_ref[...],
                     preferred_element_type=jnp.float32)
        mu = mu + b3_ref[...]
        out_ref[...] = (jnp.tanh(mu) * act_limit).astype(out_ref.dtype)

    return kernel


def prepare_params(params, obs_dim, act_dim, compute_dtype=COMPUTE_DTYPE):
    """Pad feature dims to 128 and cast weights to the MXU compute dtype.

    Do this ONCE (outside the hot loop).  Zero-padding is exact: padded obs
    columns hit zero w1 rows, padded output lanes get bias 0 and are sliced
    off by the wrapper.  Returns a tuple of arrays only (jit-friendly).
    """
    k_pad = _round_up(max(obs_dim, 1), LANE)
    n_pad = _round_up(max(act_dim, 1), LANE)

    w1 = jnp.zeros((k_pad, HIDDEN), jnp.float32).at[:obs_dim, :].set(params["w1"])
    w3 = jnp.zeros((HIDDEN, n_pad), jnp.float32).at[:, :act_dim].set(params["w3"])
    b3 = jnp.zeros((1, n_pad), jnp.float32).at[:, :act_dim].set(params["b3"])

    return (
        w1.astype(compute_dtype),
        params["b1"].astype(jnp.float32),
        params["w2"].astype(compute_dtype),
        params["b2"].astype(jnp.float32),
        w3.astype(compute_dtype),
        b3,
    )


@functools.partial(jax.jit, static_argnames=("act_dim", "act_limit"))
def actor_forward(obs, w1, b1, w2, b2, w3, b3, *, act_dim, act_limit):
    """obs: [B, obs_dim] f32.  w*/b*: output of prepare_params.
    Returns [B, act_dim] f32."""
    B, obs_dim = obs.shape
    k_pad = w1.shape[0]
    n_pad = w3.shape[1]
    compute_dtype = w1.dtype

    # --- batch tiling -------------------------------------------------------
    # Derive the tile from B: enough tiles to stay under MAX_TB, and at least
    # 2 grid steps when the batch is non-trivial so v7x's 2 TensorCores both
    # get work ("parallel" batch axis).  Tile is a multiple of 16 (bf16 packs
    # (16,128) per vreg).
    nt = max(1, -(-B // MAX_TB))
    if B > 16:
        nt = max(nt, 2)
    tb = _round_up(max(-(-B // nt), 1), 16)
    b_pad = _round_up(B, tb)
    grid = (b_pad // tb,)

    # --- obs prep: single cast+pad, fusible into the pallas_call input DMA ---
    obs_p = jnp.pad(obs.astype(compute_dtype),
                    ((0, b_pad - B), (0, k_pad - obs_dim)))

    # Rough cost hint so XLA doesn't treat the call as free.
    flops = 2 * b_pad * (k_pad * HIDDEN + HIDDEN * HIDDEN + HIDDEN * n_pad)
    bytes_accessed = (
        obs_p.size * obs_p.dtype.itemsize
        + b_pad * n_pad * 2  # bf16 output
        + sum(a.size * a.dtype.itemsize for a in (w1, b1, w2, b2, w3, b3))
    )
    cost = pl.CostEstimate(flops=flops,
                           transcendentals=b_pad * n_pad,
                           bytes_accessed=bytes_accessed)

    out_p = pl.pallas_call(
        _actor_kernel(float(act_limit)),
        out_shape=jax.ShapeDtypeStruct((b_pad, n_pad), jnp.bfloat16),
        grid=grid,
        in_specs=[
            pl.BlockSpec((tb, k_pad), lambda i: (i, 0)),        # obs tile (pipelined)
            pl.BlockSpec((k_pad, HIDDEN), lambda i: (0, 0)),    # w1 (resident)
            pl.BlockSpec((1, HIDDEN), lambda i: (0, 0)),        # b1
            pl.BlockSpec((HIDDEN, HIDDEN), lambda i: (0, 0)),   # w2
            pl.BlockSpec((1, HIDDEN), lambda i: (0, 0)),        # b2
            pl.BlockSpec((HIDDEN, n_pad), lambda i: (0, 0)),    # w3
            pl.BlockSpec((1, n_pad), lambda i: (0, 0)),         # b3
        ],
        out_specs=pl.BlockSpec((tb, n_pad), lambda i: (i, 0)),  # lane-dense bf16 out
        compiler_params=pltpu.CompilerParams(
            dimension_semantics=("parallel",),
            allow_input_fusion=[True, False, False, False, False, False, False],
        ),
        cost_estimate=cost,
    )(obs_p, w1, b1, w2, b2, w3, b3)

    return out_p[:B, :act_dim].astype(jnp.float32)


def init_actor_params(key, obs_dim, act_dim, hidden=HIDDEN):
    """Deterministic synthetic parameter init (shapes match the PyTorch module,
    weights stored [in, out] = transposed from PyTorch's [out, in])."""
    ks = jax.random.split(key, 6)

    def linear(kw, kb, fan_in, fan_out):
        bound = 1.0 / jnp.sqrt(jnp.float32(fan_in))
        w = jax.random.uniform(kw, (fan_in, fan_out), jnp.float32, -bound, bound)
        b = jax.random.uniform(kb, (1, fan_out), jnp.float32, -bound, bound)
        return w, b

    w1, b1 = linear(ks[0], ks[1], obs_dim, hidden)
    w2, b2 = linear(ks[2], ks[3], hidden, hidden)
    w3, b3 = linear(ks[4], ks[5], hidden, act_dim)
    # NOTE: the PyTorch module also defines log_std_layer, but forward() never
    # uses it, so it is omitted here.
    return {"w1": w1, "b1": b1, "w2": w2, "b2": b2, "w3": w3, "b3": b3}


def actor_reference(obs, params, act_limit):
    """Pure-JAX f32 reference for correctness checking."""
    x = jnp.maximum(obs @ params["w1"] + params["b1"], 0.0)
    x = jnp.maximum(x @ params["w2"] + params["b2"], 0.0)
    mu = x @ params["w3"] + params["b3"]
    return jnp.tanh(mu) * act_limit


if __name__ == "__main__":
    obs_dim, act_dim, act_limit = 17, 6, 1.0
    batch = 2

    key = jax.random.PRNGKey(0)
    k_params, k_obs = jax.random.split(key)
    params = init_actor_params(k_params, obs_dim, act_dim)
    w1, b1, w2, b2, w3, b3 = prepare_params(params, obs_dim, act_dim)
    obs = jax.random.normal(k_obs, (batch, obs_dim), jnp.float32)

    out = actor_forward(obs, w1, b1, w2, b2, w3, b3,
                        act_dim=act_dim, act_limit=act_limit)
    jax.block_until_ready(out)

    ref = actor_reference(obs, params, act_limit)
    assert out.shape == (batch, act_dim)
    assert bool(jnp.all(jnp.abs(out) <= act_limit + 1e-6))
    # bf16 matmul inputs + bf16 output with f32 accumulation -> loose tolerance.
    assert bool(jnp.max(jnp.abs(out - ref)) < 3e-2), jnp.max(jnp.abs(out - ref))
    print("KERNEL_OK")
</pallas_src>

<mosaic_0001>
module attributes {stable_mosaic.version = 11 : i64} {
  func.func @kernel(%arg0: i32, %arg1: memref<16x128xbf16, #tpu.memory_space<vmem>>, %arg2: memref<128x256xbf16, #tpu.memory_space<vmem>>, %arg3: memref<1x256xf32, #tpu.memory_space<vmem>>, %arg4: memref<256x256xbf16, #tpu.memory_space<vmem>>, %arg5: memref<1x256xf32, #tpu.memory_space<vmem>>, %arg6: memref<256x128xbf16, #tpu.memory_space<vmem>>, %arg7: memref<1x128xf32, #tpu.memory_space<vmem>>, %arg8: memref<16x128xbf16, #tpu.memory_space<vmem>>) attributes {dimension_semantics = [#tpu.dimension_semantics<parallel>], iteration_bounds = array<i64: 1>, scalar_prefetch = 0 : i64, scratch_operands = 0 : i64, tpu.core_type = #tpu.core_type<tc>, window_params = [{transform_indices = @transform_0, window_bounds = array<i64: 16, 128>}, {pipeline_mode = #tpu.pipeline_mode<synchronous>, transform_indices = @transform_1, window_bounds = array<i64: 128, 256>}, {pipeline_mode = #tpu.pipeline_mode<synchronous>, transform_indices = @transform_2, window_bounds = array<i64: 1, 256>}, {pipeline_mode = #tpu.pipeline_mode<synchronous>, transform_indices = @transform_3, window_bounds = array<i64: 256, 256>}, {pipeline_mode = #tpu.pipeline_mode<synchronous>, transform_indices = @transform_4, window_bounds = array<i64: 1, 256>}, {pipeline_mode = #tpu.pipeline_mode<synchronous>, transform_indices = @transform_5, window_bounds = array<i64: 256, 128>}, {pipeline_mode = #tpu.pipeline_mode<synchronous>, transform_indices = @transform_6, window_bounds = array<i64: 1, 128>}, {transform_indices = @transform_7, window_bounds = array<i64: 16, 128>}]} {
    %c0 = arith.constant 0 : index
    %c0_0 = arith.constant 0 : index
    %0 = vector.load %arg1[%c0, %c0_0] : memref<16x128xbf16, #tpu.memory_space<vmem>>, vector<16x128xbf16>
    %c0_1 = arith.constant 0 : index
    %c0_2 = arith.constant 0 : index
    %1 = vector.load %arg2[%c0_1, %c0_2] : memref<128x256xbf16, #tpu.memory_space<vmem>>, vector<128x256xbf16>
    %cst = arith.constant dense<0.000000e+00> : vector<16x256xf32>
    %2 = tpu.matmul %0, %1, %cst {dimension_numbers = #tpu.dot_dimension_numbers<[1], [0], [0], [1], [0, 0, 1, 1], [], []>} : vector<16x128xbf16>, vector<128x256xbf16>, vector<16x256xf32> -> vector<16x256xf32>
    %c0_3 = arith.constant 0 : index
    %c0_4 = arith.constant 0 : index
    %3 = vector.load %arg3[%c0_3, %c0_4] : memref<1x256xf32, #tpu.memory_space<vmem>>, vector<1x256xf32>
    %4 = vector.broadcast %3 : vector<1x256xf32> to vector<16x256xf32>
    %5 = arith.addf %2, %4 : vector<16x256xf32>
    %cst_5 = arith.constant 0.000000e+00 : f32
    %6 = vector.broadcast %cst_5 : f32 to vector<16x256xf32>
    %7 = arith.maximumf %5, %6 : vector<16x256xf32>
    %8 = arith.truncf %7 : vector<16x256xf32> to vector<16x256xbf16>
    %c0_6 = arith.constant 0 : index
    %c0_7 = arith.constant 0 : index
    %9 = vector.load %arg4[%c0_6, %c0_7] : memref<256x256xbf16, #tpu.memory_space<vmem>>, vector<256x256xbf16>
    %cst_8 = arith.constant dense<0.000000e+00> : vector<16x256xf32>
    %10 = tpu.matmul %8, %9, %cst_8 {dimension_numbers = #tpu.dot_dimension_numbers<[1], [0], [0], [1], [0, 0, 1, 1], [], []>} : vector<16x256xbf16>, vector<256x256xbf16>, vector<16x256xf32> -> vector<16x256xf32>
    %c0_9 = arith.constant 0 : index
    %c0_10 = arith.constant 0 : index
    %11 = vector.load %arg5[%c0_9, %c0_10] : memref<1x256xf32, #tpu.memory_space<vmem>>, vector<1x256xf32>
    %12 = vector.broadcast %11 : vector<1x256xf32> to vector<16x256xf32>
    %13 = arith.addf %10, %12 : vector<16x256xf32>
    %cst_11 = arith.constant 0.000000e+00 : f32
    %14 = vector.broadcast %cst_11 : f32 to vector<16x256xf32>
    %15 = arith.maximumf %13, %14 : vector<16x256xf32>
    %16 = arith.truncf %15 : vector<16x256xf32> to vector<16x256xbf16>
    %c0_12 = arith.constant 0 : index
    %c0_13 = arith.constant 0 : index
    %17 = vector.load %arg6[%c0_12, %c0_13] : memref<256x128xbf16, #tpu.memory_space<vmem>>, vector<256x128xbf16>
    %cst_14 = arith.constant dense<0.000000e+00> : vector<16x128xf32>
    %18 = tpu.matmul %16, %17, %cst_14 {dimension_numbers = #tpu.dot_dimension_numbers<[1], [0], [0], [1], [0, 0, 1, 1], [], []>} : vector<16x256xbf16>, vector<256x128xbf16>, vector<16x128xf32> -> vector<16x128xf32>
    %c0_15 = arith.constant 0 : index
    %c0_16 = arith.constant 0 : index
    %19 = vector.load %arg7[%c0_15, %c0_16] : memref<1x128xf32, #tpu.memory_space<vmem>>, vector<1x128xf32>
    %20 = vector.broadcast %19 : vector<1x128xf32> to vector<16x128xf32>
    %21 = arith.addf %18, %20 : vector<16x128xf32>
    %22 = math.tanh %21 : vector<16x128xf32>
    %cst_17 = arith.constant 1.000000e+00 : f32
    %23 = vector.broadcast %cst_17 : f32 to vector<16x128xf32>
    %24 = arith.mulf %22, %23 : vector<16x128xf32>
    %25 = arith.truncf %24 : vector<16x128xf32> to vector<16x128xbf16>
    %c0_18 = arith.constant 0 : index
    %c0_19 = arith.constant 0 : index
    %26 = vector.load %arg8[%c0_18, %c0_19] : memref<16x128xbf16, #tpu.memory_space<vmem>>, vector<16x128xbf16>
    tpu.vector_store %arg8[%c0_18, %c0_19], %25 {strides = array<i32>} : memref<16x128xbf16, #tpu.memory_space<vmem>>, vector<16x128xbf16>,
    return
  }
  func.func @transform_0(%arg0: i32) -> (i32, i32) {
    %c0_i32 = arith.constant 0 : i32
    %c0_i32_0 = arith.constant 0 : i32
    return %arg0, %c0_i32 : i32, i32
  }
  func.func @transform_1(%arg0: i32) -> (i32, i32) {
    %c0_i32 = arith.constant 0 : i32
    %c0_i32_0 = arith.constant 0 : i32
    %c0_i32_1 = arith.constant 0 : i32
    return %c0_i32, %c0_i32_0 : i32, i32
  }
  func.func @transform_2(%arg0: i32) -> (i32, i32) {
    %c0_i32 = arith.constant 0 : i32
    %c0_i32_0 = arith.constant 0 : i32
    %c0_i32_1 = arith.constant 0 : i32
    return %c0_i32, %c0_i32_0 : i32, i32
  }
  func.func @transform_3(%arg0: i32) -> (i32, i32) {
    %c0_i32 = arith.constant 0 : i32
    %c0_i32_0 = arith.constant 0 : i32
    %c0_i32_1 = arith.constant 0 : i32
    return %c0_i32, %c0_i32_0 : i32, i32
  }
  func.func @transform_4(%arg0: i32) -> (i32, i32) {
    %c0_i32 = arith.constant 0 : i32
    %c0_i32_0 = arith.constant 0 : i32
    %c0_i32_1 = arith.constant 0 : i32
    return %c0_i32, %c0_i32_0 : i32, i32
  }
  func.func @transform_5(%arg0: i32) -> (i32, i32) {
    %c0_i32 = arith.constant 0 : i32
    %c0_i32_0 = arith.constant 0 : i32
    %c0_i32_1 = arith.constant 0 : i32
    return %c0_i32, %c0_i32_0 : i32, i32
  }
  func.func @transform_6(%arg0: i32) -> (i32, i32) {
    %c0_i32 = arith.constant 0 : i32
    %c0_i32_0 = arith.constant 0 : i32
    %c0_i32_1 = arith.constant 0 : i32
    return %c0_i32, %c0_i32_0 : i32, i32
  }
  func.func @transform_7(%arg0: i32) -> (i32, i32) {
    %c0_i32 = arith.constant 0 : i32
    %c0_i32_0 = arith.constant 0 : i32
    return %arg0, %c0_i32 : i32, i32
  }
}

</mosaic_0001>

<llo_original>
// kernel: actor_forward.2
$region0: #{actor_forward.2}
  #allocation0 [shape = 'u32[]', space=smem, size = 0x4, offset = 0x4, fixed_abs, tag = 'smem constant byte address 0x4 - core index']
  #allocation1 [shape = 'u32[144,128]{1,0:T(1,128)}', space=vmem, size = 0x12000, scoped, tag = 'internal scratch']
  #allocation2 [shape = 'u32[2048]{0}', space=vmem, size = 0x2000, scoped, tag = 'scoped memory for actor_forward.2']
  #allocation3 [shape = 'u32[2048]{0}', space=vmem, size = 0x2000, scoped, tag = 'scoped memory for actor_forward.2']
  #allocation4 [shape = 'u32[2048]{0}', space=vmem, size = 0x2000, scoped, tag = 'scoped memory for actor_forward.2']
  #allocation5 [shape = 'u32[2048]{0}', space=vmem, size = 0x2000, scoped, tag = 'scoped memory for actor_forward.2']
  #allocation6 [shape = 'u32[2048]{0}', space=vmem, size = 0x2000, scoped, tag = 'scoped memory for actor_forward.2']
  %s0 = inlined_call_operand.hbm [shape: bf16[128,256], index: 0, kind: input, shape index: {}]
  %s1 = inlined_call_operand.vmem [shape: f32[1,256], index: 1, kind: input, shape index: {}]
  %s2 = inlined_call_operand.hbm [shape: bf16[256,256], index: 2, kind: input, shape index: {}]
  %s3 = inlined_call_operand.vmem [shape: f32[1,256], index: 3, kind: input, shape index: {}]
  %s4 = inlined_call_operand.hbm [shape: bf16[256,128], index: 4, kind: input, shape index: {}]
  %s5 = inlined_call_operand.vmem [shape: f32[1,128], index: 5, kind: input, shape index: {}]
  %s6 = inlined_call_operand.vmem [shape: bf16[2,17], index: 6, kind: input, shape index: {}]
  %s7 = inlined_call_operand.<no memory space> [shape: bf16[], index: 7, kind: input, shape index: {}]
  %s8 = inlined_call_operand.vmem [shape: bf16[16,128], index: 8, kind: output, shape index: {}]
  %s9 = sld [smem:[#allocation0]]
  $region50: #{actor_forward.2} parent=0
    _
  %s11 = ssub.s32 1, %s9
  %s12 = scalar_select 0, %s11, %s9
  %v13 = vstv %s7
  %v14 = vunpack.i.l.bf16 %v13
  %v16 = vunpack.i.h.bf16 %v13
  $region1: #{actor_forward.2} parent=0
    #allocation7 [shape = 'u8[65536]{0}', space=vmem, size = 0x10000, scoped, tag = 'input window, operand 1, single buffered']
    #allocation8 [shape = 's32[1]{0}', space=sflag, size = 0x4, scoped, tag = 'scoped memory for actor_forward.2']
    #allocation9 [shape = 'u8[131072]{0}', space=vmem, size = 0x20000, scoped, tag = 'input window, operand 3, single buffered']
    #allocation10 [shape = 's32[1]{0}', space=sflag, size = 0x4, scoped, tag = 'scoped memory for actor_forward.2']
    #allocation11 [shape = 'u8[65536]{0}', space=vmem, size = 0x10000, scoped, tag = 'input window, operand 5, single buffered']
    #allocation12 [shape = 'u8[4096]{0}', space=vmem, size = 0x1000, dematerialized = true, scoped, tag = 'FusionAdapter Buffer %fusion.1 = bf16[16,128]{1,0:T(8,128)(2,1)} fusion(%param_6.1, %param_7), kind=kLoop, calls=%fused_computation.1.clone, metadata={op_name="jit(actor_forward)/jit(_pad)/pad" stack_frame_id=8}']
    %18 = vsyncpa [#allocation8], 0
    %19 = vsyncpa [#allocation10], 0
    // Predicated region
    $region2: #{actor_forward.2} parent=1 // pred_check
      _
    $region3: #{actor_forward.2} parent=1 // pred_check_branch
      %21 = sbr.rel (0) target = $region5
    $region4: #{actor_forward.2} parent=1 // pred_region
      _
    $region5: #{actor_forward.2} parent=1 // pred_fallthru
      _
    // Predicated region
    $region6: #{actor_forward.2} parent=1 // pred_check
      _
    $region7: #{actor_forward.2} parent=1 // pred_check_branch
      %23 = sbr.rel (0) target = $region9
    $region8: #{actor_forward.2} parent=1 // pred_region
      %s25 = ssub.s32 2048, 2048
      %26 = vsyncadd [#allocation8], %s25
      %s27 = sshll.u32 [#allocation7], 4
      %s28 = int_to_ptr.vmem [resolvable:$true] %s27
      %33 = dma.hbm_to_vmem [thread:$0]  %s0, 2048, %s28, [#allocation8], 128, 128, 8
    $region9: #{actor_forward.2} parent=1 // pred_fallthru
      _
    // Predicated region
    $region10: #{actor_forward.2} parent=1 // pred_check
      _
    $region11: #{actor_forward.2} parent=1 // pred_check_branch
      %35 = sbr.rel (0) target = $region13
    $region12: #{actor_forward.2} parent=1 // pred_region
      _
    $region13: #{actor_forward.2} parent=1 // pred_fallthru
      _
    // Predicated region
    $region14: #{actor_forward.2} parent=1 // pred_check
      _
    $region15: #{actor_forward.2} parent=1 // pred_check_branch
      %37 = sbr.rel (0) target = $region17
    $region16: #{actor_forward.2} parent=1 // pred_region
      %s39 = ssub.s32 4096, 4096
      %40 = vsyncadd [#allocation10], %s39
      %s41 = sshll.u32 [#allocation9], 4
      %s42 = int_to_ptr.vmem [resolvable:$true] %s41
      %47 = dma.hbm_to_vmem [thread:$0]  %s2, 4096, %s42, [#allocation10], 128, 128, 8
    $region17: #{actor_forward.2} parent=1 // pred_fallthru
      _
    // Predicated region
    $region18: #{actor_forward.2} parent=1 // pred_check
      _
    $region19: #{actor_forward.2} parent=1 // pred_check_branch
      %49 = sbr.rel (0) target = $region21
    $region20: #{actor_forward.2} parent=1 // pred_region
      _
    $region21: #{actor_forward.2} parent=1 // pred_fallthru
      _
    // Predicated region
    $region22: #{actor_forward.2} parent=1 // pred_check
      _
    $region23: #{actor_forward.2} parent=1 // pred_check_branch
      %51 = sbr.rel (0) target = $region25
    $region24: #{actor_forward.2} parent=1 // pred_region
      %s53 = ssub.s32 2048, 2048
      %54 = vsyncadd [#allocation10], %s53
      %s55 = sshll.u32 [#allocation11], 4
      %s56 = int_to_ptr.vmem [resolvable:$true] %s55
      %61 = dma.hbm_to_vmem [thread:$0]  %s4, 2048, %s56, [#allocation10], 64, 64, 4
    $region25: #{actor_forward.2} parent=1 // pred_fallthru
      _
    // Predicated region
    $region26: #{actor_forward.2} parent=1 // pred_check
      _
    $region27: #{actor_forward.2} parent=1 // pred_check_branch
      %63 = sbr.rel (0) target = $region29
    $region28: #{actor_forward.2} parent=1 // pred_region
      _
    $region29: #{actor_forward.2} parent=1 // pred_fallthru
      _
    // Predicated region
    $region30: #{actor_forward.2} parent=1 // pred_check
      _
    $region31: #{actor_forward.2} parent=1 // pred_check_branch
      %65 = sbr.rel (0) target = $region33
    $region32: #{actor_forward.2} parent=1 // pred_region
      %66 = dma.done [#allocation8], 2048
    $region33: #{actor_forward.2} parent=1 // pred_fallthru
      _
    // Predicated region
    $region34: #{actor_forward.2} parent=1 // pred_check
      _
    $region35: #{actor_forward.2} parent=1 // pred_check_branch
      %68 = sbr.rel (0) target = $region37
    $region36: #{actor_forward.2} parent=1 // pred_region
      %69 = dma.done [#allocation10], 4096
    $region37: #{actor_forward.2} parent=1 // pred_fallthru
      _
    // Predicated region
    $region38: #{actor_forward.2} parent=1 // pred_check
      _
    $region39: #{actor_forward.2} parent=1 // pred_check_branch
      %71 = sbr.rel (0) target = $region41
    $region40: #{actor_forward.2} parent=1 // pred_region
      %72 = dma.done [#allocation10], 2048
    $region41: #{actor_forward.2} parent=1 // pred_fallthru
      _
    %s74 = sor.u32 3, 1
    %s75 = sand.u32 %s74, 1
    %v76 = vld [vmem:[%s6] sm:%s75]
    %v77 = vunpack.c.l.bf16 %v76
    %v78 = vunpack.c.h.bf16 %v76
    %v79 = vlaneseq
    %v80 = vshrl.u32 %v79, 7
    %vm82 = vcmp.lt.s32.totalorder %v80, 2
    %v83 = vsel %vm82, %v77, %v14
    %v84 = vlaneseq
    %v85 = vand.u32 %v84, 127
    %vm87 = vcmp.lt.s32.totalorder %v85, 17
    %v88 = vsel %vm87, %v83, %v14
    %v89 = vpack.c.bf16 0.0, %v88
    %s91 = ssub.s32 16, 1
    %92 = vst [vmem:[#allocation12] sm:%s91] %v89
    %s93 = scalar_lea.vmem [#allocation12], 4
    %v94 = vpack.c.bf16 0.0, %v14
    %s96 = ssub.s32 16, 1
    %97 = vst [vmem:[%s93] sm:%s96] %v94
    %v99 = vld [vmem:[#allocation12] sm:$0xf]
    %v100 = vld [vmem:[#allocation12 + $0x4] sm:$0xf]
    %v101 = vld [vmem:[#allocation7] sm:$0xff]
    %v102 = vld [vmem:[#allocation7 + $0x8] sm:$0xff]
    %v103 = vld [vmem:[#allocation7 + $0x10] sm:$0xff]
    %v104 = vld [vmem:[#allocation7 + $0x18] sm:$0xff]
    %v105 = vld [vmem:[#allocation7 + $0x20] sm:$0xff]
    %v106 = vld [vmem:[#allocation7 + $0x28] sm:$0xff]
    %v107 = vld [vmem:[#allocation7 + $0x30] sm:$0xff]
    %v108 = vld [vmem:[#allocation7 + $0x38] sm:$0xff]
    %v109 = vld [vmem:[#allocation7 + $0x40] sm:$0xff]
    %v110 = vld [vmem:[#allocation7 + $0x48] sm:$0xff]
    %v111 = vld [vmem:[#allocation7 + $0x50] sm:$0xff]
    %v112 = vld [vmem:[#allocation7 + $0x58] sm:$0xff]
    %v113 = vld [vmem:[#allocation7 + $0x60] sm:$0xff]
    %v114 = vld [vmem:[#allocation7 + $0x68] sm:$0xff]
    %v115 = vld [vmem:[#allocation7 + $0x70] sm:$0xff]
    %v116 = vld [vmem:[#allocation7 + $0x78] sm:$0xff]
    %v117 = vld [vmem:[%s1] sm:$0x3]
    %v119 = vlaneseq
    %v120 = vshrl.u32 %v119, 7
    %v121 = vsub.s32 0, %v120
    %v122 = vrot.slane %v117, %v121
    %v123 = vlaneseq
    %v124 = vshrl.u32 %v123, 7
    %v125 = vsub.s32 1, %v124
    %v126 = vrot.slane %v117, %v125
    %v131 = vunpack.c.l.b16 %v99
    %v132 = vunpack.c.l.b16 %v100
    %v133 = vpack.c.b16 %v132, %v131
    %v151 = vunpack.c.l.b16 %v101
    %v152 = vunpack.c.h.b16 %v101
    %v153 = vunpack.c.l.b16 %v102
    %v154 = vunpack.c.h.b16 %v102
    %v155 = vunpack.c.l.b16 %v103
    %v156 = vunpack.c.h.b16 %v103
    %v157 = vunpack.c.l.b16 %v104
    %v158 = vunpack.c.h.b16 %v104
    %v159 = vunpack.c.l.b16 %v105
    %v160 = vunpack.c.h.b16 %v105
    %v161 = vunpack.c.l.b16 %v106
    %v162 = vunpack.c.h.b16 %v106
    %v163 = vunpack.c.l.b16 %v107
    %v164 = vunpack.c.h.b16 %v107
    %v165 = vunpack.c.l.b16 %v108
    %v166 = vunpack.c.h.b16 %v108
    %v167 = vunpack.c.l.b16 %v109
    %v168 = vunpack.c.h.b16 %v109
    %v169 = vunpack.c.l.b16 %v110
    %v170 = vunpack.c.h.b16 %v110
    %v171 = vunpack.c.l.b16 %v111
    %v172 = vunpack.c.h.b16 %v111
    %v173 = vunpack.c.l.b16 %v112
    %v174 = vunpack.c.h.b16 %v112
    %v175 = vunpack.c.l.b16 %v113
    %v176 = vunpack.c.h.b16 %v113
    %v177 = vunpack.c.l.b16 %v114
    %v178 = vunpack.c.h.b16 %v114
    %v179 = vunpack.c.l.b16 %v115
    %v180 = vunpack.c.h.b16 %v115
    %v181 = vunpack.c.l.b16 %v116
    %v182 = vunpack.c.h.b16 %v116
    %v183 = vpack.c.b16 %v153, %v151
    %v184 = vpack.c.b16 %v154, %v152
    %v185 = vpack.c.b16 %v157, %v155
    %v186 = vpack.c.b16 %v158, %v156
    %v187 = vpack.c.b16 %v161, %v159
    %v188 = vpack.c.b16 %v162, %v160
    %v189 = vpack.c.b16 %v165, %v163
    %v190 = vpack.c.b16 %v166, %v164
    %v191 = vpack.c.b16 %v169, %v167
    %v192 = vpack.c.b16 %v170, %v168
    %v193 = vpack.c.b16 %v173, %v171
    %v194 = vpack.c.b16 %v174, %v172
    %v195 = vpack.c.b16 %v177, %v175
    %v196 = vpack.c.b16 %v178, %v176
    %v197 = vpack.c.b16 %v181, %v179
    %v198 = vpack.c.b16 %v182, %v180
    %215 = vmatprep.subr.bf16.mxu0 %v198
    %216 = vmatpush1.bf16.msra.mxu0 %v197
    %217 = vmatprep.subr.bf16.mxu0 %v196
    %218 = vmatpush1.bf16.msra.mxu0 %v195
    %219 = vmatprep.subr.bf16.mxu0 %v194
    %220 = vmatpush1.bf16.msra.mxu0 %v193
    %221 = vmatprep.subr.bf16.mxu0 %v192
    %222 = vmatpush1.bf16.msra.mxu0 %v191
    %223 = vmatprep.subr.bf16.mxu0 %v190
    %224 = vmatpush1.bf16.msra.mxu0 %v189
    %225 = vmatprep.subr.bf16.mxu0 %v188
    %226 = vmatpush1.bf16.msra.mxu0 %v187
    %227 = vmatprep.subr.bf16.mxu0 %v186
    %228 = vmatpush1.bf16.msra.mxu0 %v185
    %229 = vmatprep.subr.bf16.mxu0 %v184
    %230 = vmatpush1.bf16.msra.mxu0 %v183
    %231 = vmatprep.subr.bf16.mxu0 0
    %232 = vmatpush2.bf16.msra.mxu0 0
    %233 = vmatprep.subr.bf16.mxu0 0
    %234 = vmatpush2.bf16.msra.mxu0 0
    %235 = vmatprep.subr.bf16.mxu0 0
    %236 = vmatpush2.bf16.msra.mxu0 0
    %237 = vmatprep.subr.bf16.mxu0 0
    %238 = vmatpush2.bf16.msra.mxu0 0
    %239 = vmatprep.subr.bf16.mxu0 0
    %240 = vmatpush2.bf16.msra.mxu0 0
    %241 = vmatprep.subr.bf16.mxu0 0
    %242 = vmatpush2.bf16.msra.mxu0 0
    %243 = vmatprep.subr.bf16.mxu0 0
    %244 = vmatpush2.bf16.msra.mxu0 0
    %245 = vmatprep.subr.bf16.mxu0 0
    %246 = vmatpush2.bf16.msra.mxu0 0
    %247 = vmatprep.mubr.bf16.mxu0 0
    %248 = vmatmul.mubr.bf16.gmra.mxu0 %v133
    %v249 = vpop.f32.mrf.mxu0
    %v250 = vadd.f32 %v122, %v249
    %v251 = vpop.f32.mrf.mxu0
    %v252 = vadd.f32 %v126, %v251
    %v253 = vpop.f32.mrf.mxu0
    %v254 = vadd.f32 %v122, %v253
    %v255 = vpop.f32.mrf.mxu0
    %v256 = vadd.f32 %v126, %v255
    %257 = vdwg.mxu0
    %v258 = vmax.f32 %v250, 0.0
    %v259 = vmax.f32 %v252, 0.0
    %v260 = vmax.f32 %v254, 0.0
    %v261 = vmax.f32 %v256, 0.0
    %v262 = vpack.c.bf16 %v260, %v258
    %v263 = vpack.c.bf16 %v261, %v259
    %v264 = vld [vmem:[#allocation9] sm:$0xff]
    %v265 = vld [vmem:[#allocation9 + $0x8] sm:$0xff]
    %v266 = vld [vmem:[#allocation9 + $0x10] sm:$0xff]
    %v267 = vld [vmem:[#allocation9 + $0x18] sm:$0xff]
    %v268 = vld [vmem:[#allocation9 + $0x20] sm:$0xff]
    %v269 = vld [vmem:[#allocation9 + $0x28] sm:$0xff]
    %v270 = vld [vmem:[#allocation9 + $0x30] sm:$0xff]
    %v271 = vld [vmem:[#allocation9 + $0x38] sm:$0xff]
    %v272 = vld [vmem:[#allocation9 + $0x40] sm:$0xff]
    %v273 = vld [vmem:[#allocation9 + $0x48] sm:$0xff]
    %v274 = vld [vmem:[#allocation9 + $0x50] sm:$0xff]
    %v275 = vld [vmem:[#allocation9 + $0x58] sm:$0xff]
    %v276 = vld [vmem:[#allocation9 + $0x60] sm:$0xff]
    %v277 = vld [vmem:[#allocation9 + $0x68] sm:$0xff]
    %v278 = vld [vmem:[#allocation9 + $0x70] sm:$0xff]
    %v279 = vld [vmem:[#allocation9 + $0x78] sm:$0xff]
    %v280 = vld [vmem:[#allocation9 + $0x80] sm:$0xff]
    %v281 = vld [vmem:[#allocation9 + $0x88] sm:$0xff]
    %v282 = vld [vmem:[#allocation9 + $0x90] sm:$0xff]
    %v283 = vld [vmem:[#allocation9 + $0x98] sm:$0xff]
    %v284 = vld [vmem:[#allocation9 + $0xa0] sm:$0xff]
    %v285 = vld [vmem:[#allocation9 + $0xa8] sm:$0xff]
    %v286 = vld [vmem:[#allocation9 + $0xb0] sm:$0xff]
    %v287 = vld [vmem:[#allocation9 + $0xb8] sm:$0xff]
    %v288 = vld [vmem:[#allocation9 + $0xc0] sm:$0xff]
    %v289 = vld [vmem:[#allocation9 + $0xc8] sm:$0xff]
    %v290 = vld [vmem:[#allocation9 + $0xd0] sm:$0xff]
    %v291 = vld [vmem:[#allocation9 + $0xd8] sm:$0xff]
    %v292 = vld [vmem:[#allocation9 + $0xe0] sm:$0xff]
    %v293 = vld [vmem:[#allocation9 + $0xe8] sm:$0xff]
    %v294 = vld [vmem:[#allocation9 + $0xf0] sm:$0xff]
    %v295 = vld [vmem:[#allocation9 + $0xf8] sm:$0xff]
    %v296 = vld [vmem:[%s3] sm:$0x3]
    %v298 = vlaneseq
    %v299 = vshrl.u32 %v298, 7
    %v300 = vsub.s32 0, %v299
    %v301 = vrot.slane %v296, %v300
    %v302 = vlaneseq
    %v303 = vshrl.u32 %v302, 7
    %v304 = vsub.s32 1, %v303
    %v305 = vrot.slane %v296, %v304
    %v340 = vunpack.c.l.b16 %v264
    %v341 = vunpack.c.h.b16 %v264
    %v342 = vunpack.c.l.b16 %v265
    %v343 = vunpack.c.h.b16 %v265
    %v344 = vunpack.c.l.b16 %v266
    %v345 = vunpack.c.h.b16 %v266
    %v346 = vunpack.c.l.b16 %v267
    %v347 = vunpack.c.h.b16 %v267
    %v348 = vunpack.c.l.b16 %v268
    %v349 = vunpack.c.h.b16 %v268
    %v350 = vunpack.c.l.b16 %v269
    %v351 = vunpack.c.h.b16 %v269
    %v352 = vunpack.c.l.b16 %v270
    %v353 = vunpack.c.h.b16 %v270
    %v354 = vunpack.c.l.b16 %v271
    %v355 = vunpack.c.h.b16 %v271
    %v356 = vunpack.c.l.b16 %v272
    %v357 = vunpack.c.h.b16 %v272
    %v358 = vunpack.c.l.b16 %v273
    %v359 = vunpack.c.h.b16 %v273
    %v360 = vunpack.c.l.b16 %v274
    %v361 = vunpack.c.h.b16 %v274
    %v362 = vunpack.c.l.b16 %v275
    %v363 = vunpack.c.h.b16 %v275
    %v364 = vunpack.c.l.b16 %v276
    %v365 = vunpack.c.h.b16 %v276
    %v366 = vunpack.c.l.b16 %v277
    %v367 = vunpack.c.h.b16 %v277
    %v368 = vunpack.c.l.b16 %v278
    %v369 = vunpack.c.h.b16 %v278
    %v370 = vunpack.c.l.b16 %v279
    %v371 = vunpack.c.h.b16 %v279
    %v372 = vunpack.c.l.b16 %v280
    %v373 = vunpack.c.h.b16 %v280
    %v374 = vunpack.c.l.b16 %v281
    %v375 = vunpack.c.h.b16 %v281
    %v376 = vunpack.c.l.b16 %v282
    %v377 = vunpack.c.h.b16 %v282
    %v378 = vunpack.c.l.b16 %v283
    %v379 = vunpack.c.h.b16 %v283
    %v380 = vunpack.c.l.b16 %v284
    %v381 = vunpack.c.h.b16 %v284
    %v382 = vunpack.c.l.b16 %v285
    %v383 = vunpack.c.h.b16 %v285
    %v384 = vunpack.c.l.b16 %v286
    %v385 = vunpack.c.h.b16 %v286
    %v386 = vunpack.c.l.b16 %v287
    %v387 = vunpack.c.h.b16 %v287
    %v388 = vunpack.c.l.b16 %v288
    %v389 = vunpack.c.h.b16 %v288
    %v390 = vunpack.c.l.b16 %v289
    %v391 = vunpack.c.h.b16 %v289
    %v392 = vunpack.c.l.b16 %v290
    %v393 = vunpack.c.h.b16 %v290
    %v394 = vunpack.c.l.b16 %v291
    %v395 = vunpack.c.h.b16 %v291
    %v396 = vunpack.c.l.b16 %v292
    %v397 = vunpack.c.h.b16 %v292
    %v398 = vunpack.c.l.b16 %v293
    %v399 = vunpack.c.h.b16 %v293
    %v400 = vunpack.c.l.b16 %v294
    %v401 = vunpack.c.h.b16 %v294
    %v402 = vunpack.c.l.b16 %v295
    %v403 = vunpack.c.h.b16 %v295
    %v404 = vpack.c.b16 %v342, %v340
    %v405 = vpack.c.b16 %v343, %v341
    %v406 = vpack.c.b16 %v346, %v344
    %v407 = vpack.c.b16 %v347, %v345
    %v408 = vpack.c.b16 %v350, %v348
    %v409 = vpack.c.b16 %v351, %v349
    %v410 = vpack.c.b16 %v354, %v352
    %v411 = vpack.c.b16 %v355, %v353
    %v412 = vpack.c.b16 %v358, %v356
    %v413 = vpack.c.b16 %v359, %v357
    %v414 = vpack.c.b16 %v362, %v360
    %v415 = vpack.c.b16 %v363, %v361
    %v416 = vpack.c.b16 %v366, %v364
    %v417 = vpack.c.b16 %v367, %v365
    %v418 = vpack.c.b16 %v370, %v368
    %v419 = vpack.c.b16 %v371, %v369
    %v420 = vpack.c.b16 %v374, %v372
    %v421 = vpack.c.b16 %v375, %v373
    %v422 = vpack.c.b16 %v378, %v376
    %v423 = vpack.c.b16 %v379, %v377
    %v424 = vpack.c.b16 %v382, %v380
    %v425 = vpack.c.b16 %v383, %v381
    %v426 = vpack.c.b16 %v386, %v384
    %v427 = vpack.c.b16 %v387, %v385
    %v428 = vpack.c.b16 %v390, %v388
    %v429 = vpack.c.b16 %v391, %v389
    %v430 = vpack.c.b16 %v394, %v392
    %v431 = vpack.c.b16 %v395, %v393
    %v432 = vpack.c.b16 %v398, %v396
    %v433 = vpack.c.b16 %v399, %v397
    %v434 = vpack.c.b16 %v402, %v400
    %v435 = vpack.c.b16 %v403, %v401
    %468 = vmatprep.subr.bf16.mxu0 %v419
    %469 = vmatpush1.bf16.msra.mxu0 %v418
    %470 = vmatprep.subr.bf16.mxu0 %v417
    %471 = vmatpush1.bf16.msra.mxu0 %v416
    %472 = vmatprep.subr.bf16.mxu0 %v415
    %473 = vmatpush1.bf16.msra.mxu0 %v414
    %474 = vmatprep.subr.bf16.mxu0 %v413
    %475 = vmatpush1.bf16.msra.mxu0 %v412
    %476 = vmatprep.subr.bf16.mxu0 %v411
    %477 = vmatpush1.bf16.msra.mxu0 %v410
    %478 = vmatprep.subr.bf16.mxu0 %v409
    %479 = vmatpush1.bf16.msra.mxu0 %v408
    %480 = vmatprep.subr.bf16.mxu0 %v407
    %481 = vmatpush1.bf16.msra.mxu0 %v406
    %482 = vmatprep.subr.bf16.mxu0 %v405
    %483 = vmatpush1.bf16.msra.mxu0 %v404
    %484 = vmatprep.subr.bf16.mxu0 %v435
    %485 = vmatpush2.bf16.msra.mxu0 %v434
    %486 = vmatprep.subr.bf16.mxu0 %v433
    %487 = vmatpush2.bf16.msra.mxu0 %v432
    %488 = vmatprep.subr.bf16.mxu0 %v431
    %489 = vmatpush2.bf16.msra.mxu0 %v430
    %490 = vmatprep.subr.bf16.mxu0 %v429
    %491 = vmatpush2.bf16.msra.mxu0 %v428
    %492 = vmatprep.subr.bf16.mxu0 %v427
    %493 = vmatpush2.bf16.msra.mxu0 %v426
    %494 = vmatprep.subr.bf16.mxu0 %v425
    %495 = vmatpush2.bf16.msra.mxu0 %v424
    %496 = vmatprep.subr.bf16.mxu0 %v423
    %497 = vmatpush2.bf16.msra.mxu0 %v422
    %498 = vmatprep.subr.bf16.mxu0 %v421
    %499 = vmatpush2.bf16.msra.mxu0 %v420
    %500 = vmatprep.mubr.bf16.mxu0 %v263
    %501 = vmatmul.mubr.bf16.gmra.mxu0 %v262
    %v502 = vpop.f32.mrf.mxu0
    %v503 = vadd.f32 %v301, %v502
    %v504 = vpop.f32.mrf.mxu0
    %v505 = vadd.f32 %v305, %v504
    %v506 = vpop.f32.mrf.mxu0
    %v507 = vadd.f32 %v301, %v506
    %v508 = vpop.f32.mrf.mxu0
    %v509 = vadd.f32 %v305, %v508
    %510 = vdwg.mxu0
    %v511 = vmax.f32 %v503, 0.0
    %v512 = vmax.f32 %v505, 0.0
    %v513 = vmax.f32 %v507, 0.0
    %v514 = vmax.f32 %v509, 0.0
    %v515 = vpack.c.bf16 %v513, %v511
    %v516 = vpack.c.bf16 %v514, %v512
    %v517 = vld [vmem:[#allocation11] sm:$0xf]
    %v518 = vld [vmem:[#allocation11 + $0x4] sm:$0xf]
    %v519 = vld [vmem:[#allocation11 + $0x8] sm:$0xf]
    %v520 = vld [vmem:[#allocation11 + $0xc] sm:$0xf]
    %v521 = vld [vmem:[#allocation11 + $0x10] sm:$0xf]
    %v522 = vld [vmem:[#allocation11 + $0x14] sm:$0xf]
    %v523 = vld [vmem:[#allocation11 + $0x18] sm:$0xf]
    %v524 = vld [vmem:[#allocation11 + $0x1c] sm:$0xf]
    %v525 = vld [vmem:[#allocation11 + $0x20] sm:$0xf]
    %v526 = vld [vmem:[#allocation11 + $0x24] sm:$0xf]
    %v527 = vld [vmem:[#allocation11 + $0x28] sm:$0xf]
    %v528 = vld [vmem:[#allocation11 + $0x2c] sm:$0xf]
    %v529 = vld [vmem:[#allocation11 + $0x30] sm:$0xf]
    %v530 = vld [vmem:[#allocation11 + $0x34] sm:$0xf]
    %v531 = vld [vmem:[#allocation11 + $0x38] sm:$0xf]
    %v532 = vld [vmem:[#allocation11 + $0x3c] sm:$0xf]
    %v533 = vld [vmem:[#allocation11 + $0x40] sm:$0xf]
    %v534 = vld [vmem:[#allocation11 + $0x44] sm:$0xf]
    %v535 = vld [vmem:[#allocation11 + $0x48] sm:$0xf]
    %v536 = vld [vmem:[#allocation11 + $0x4c] sm:$0xf]
    %v537 = vld [vmem:[#allocation11 + $0x50] sm:$0xf]
    %v538 = vld [vmem:[#allocation11 + $0x54] sm:$0xf]
    %v539 = vld [vmem:[#allocation11 + $0x58] sm:$0xf]
    %v540 = vld [vmem:[#allocation11 + $0x5c] sm:$0xf]
    %v541 = vld [vmem:[#allocation11 + $0x60] sm:$0xf]
    %v542 = vld [vmem:[#allocation11 + $0x64] sm:$0xf]
    %v543 = vld [vmem:[#allocation11 + $0x68] sm:$0xf]
    %v544 = vld [vmem:[#allocation11 + $0x6c] sm:$0xf]
    %v545 = vld [vmem:[#allocation11 + $0x70] sm:$0xf]
    %v546 = vld [vmem:[#allocation11 + $0x74] sm:$0xf]
    %v547 = vld [vmem:[#allocation11 + $0x78] sm:$0xf]
    %v548 = vld [vmem:[#allocation11 + $0x7c] sm:$0xf]
    %v549 = vld [vmem:[%s5] sm:$0x1]
    %v551 = vlaneseq
    %v552 = vshrl.u32 %v551, 7
    %v553 = vsub.s32 0, %v552
    %v554 = vrot.slane %v549, %v553
    %v588 = vunpack.c.l.b16 %v517
    %v589 = vunpack.c.l.b16 %v518
    %v590 = vunpack.c.l.b16 %v519
    %v591 = vunpack.c.l.b16 %v520
    %v592 = vunpack.c.l.b16 %v521
    %v593 = vunpack.c.l.b16 %v522
    %v594 = vunpack.c.l.b16 %v523
    %v595 = vunpack.c.l.b16 %v524
    %v596 = vunpack.c.l.b16 %v525
    %v597 = vunpack.c.l.b16 %v526
    %v598 = vunpack.c.l.b16 %v527
    %v599 = vunpack.c.l.b16 %v528
    %v600 = vunpack.c.l.b16 %v529
    %v601 = vunpack.c.l.b16 %v530
    %v602 = vunpack.c.l.b16 %v531
    %v603 = vunpack.c.l.b16 %v532
    %v604 = vunpack.c.l.b16 %v533
    %v605 = vunpack.c.l.b16 %v534
    %v606 = vunpack.c.l.b16 %v535
    %v607 = vunpack.c.l.b16 %v536
    %v608 = vunpack.c.l.b16 %v537
    %v609 = vunpack.c.l.b16 %v538
    %v610 = vunpack.c.l.b16 %v539
    %v611 = vunpack.c.l.b16 %v540
    %v612 = vunpack.c.l.b16 %v541
    %v613 = vunpack.c.l.b16 %v542
    %v614 = vunpack.c.l.b16 %v543
    %v615 = vunpack.c.l.b16 %v544
    %v616 = vunpack.c.l.b16 %v545
    %v617 = vunpack.c.l.b16 %v546
    %v618 = vunpack.c.l.b16 %v547
    %v619 = vunpack.c.l.b16 %v548
    %v620 = vpack.c.b16 %v589, %v588
    %v621 = vpack.c.b16 %v591, %v590
    %v622 = vpack.c.b16 %v593, %v592
    %v623 = vpack.c.b16 %v595, %v594
    %v624 = vpack.c.b16 %v597, %v596
    %v625 = vpack.c.b16 %v599, %v598
    %v626 = vpack.c.b16 %v601, %v600
    %v627 = vpack.c.b16 %v603, %v602
    %v628 = vpack.c.b16 %v605, %v604
    %v629 = vpack.c.b16 %v607, %v606
    %v630 = vpack.c.b16 %v609, %v608
    %v631 = vpack.c.b16 %v611, %v610
    %v632 = vpack.c.b16 %v613, %v612
    %v633 = vpack.c.b16 %v615, %v614
    %v634 = vpack.c.b16 %v617, %v616
    %v635 = vpack.c.b16 %v619, %v618
    %652 = vmatprep.subr.bf16.mxu0 0
    %653 = vmatpush1.bf16.msra.mxu0 %v627
    %654 = vmatprep.subr.bf16.mxu0 0
    %655 = vmatpush1.bf16.msra.mxu0 %v626
    %656 = vmatprep.subr.bf16.mxu0 0
    %657 = vmatpush1.bf16.msra.mxu0 %v625
    %658 = vmatprep.subr.bf16.mxu0 0
    %659 = vmatpush1.bf16.msra.mxu0 %v624
    %660 = vmatprep.subr.bf16.mxu0 0
    %661 = vmatpush1.bf16.msra.mxu0 %v623
    %662 = vmatprep.subr.bf16.mxu0 0
    %663 = vmatpush1.bf16.msra.mxu0 %v622
    %664 = vmatprep.subr.bf16.mxu0 0
    %665 = vmatpush1.bf16.msra.mxu0 %v621
    %666 = vmatprep.subr.bf16.mxu0 0
    %667 = vmatpush1.bf16.msra.mxu0 %v620
    %668 = vmatprep.subr.bf16.mxu0 0
    %669 = vmatpush2.bf16.msra.mxu0 %v635
    %670 = vmatprep.subr.bf16.mxu0 0
    %671 = vmatpush2.bf16.msra.mxu0 %v634
    %672 = vmatprep.subr.bf16.mxu0 0
    %673 = vmatpush2.bf16.msra.mxu0 %v633
    %674 = vmatprep.subr.bf16.mxu0 0
    %675 = vmatpush2.bf16.msra.mxu0 %v632
    %676 = vmatprep.subr.bf16.mxu0 0
    %677 = vmatpush2.bf16.msra.mxu0 %v631
    %678 = vmatprep.subr.bf16.mxu0 0
    %679 = vmatpush2.bf16.msra.mxu0 %v630
    %680 = vmatprep.subr.bf16.mxu0 0
    %681 = vmatpush2.bf16.msra.mxu0 %v629
    %682 = vmatprep.subr.bf16.mxu0 0
    %683 = vmatpush2.bf16.msra.mxu0 %v628
    %684 = vmatprep.mubr.bf16.mxu0 %v516
    %685 = vmatmul.mubr.bf16.gmra.mxu0 %v515
    %v686 = vpop.f32.mrf.mxu0
    %v687 = vadd.f32 %v554, %v686
    %v688 = vpop.f32.mrf.mxu0
    %v689 = vpop.f32.mrf.mxu0
    %v690 = vadd.f32 %v554, %v689
    %v691 = vpop.f32.mrf.mxu0
    %692 = vdwg.mxu0
    %v693 = vtanh.pop %v687
    %v694 = vtanh.pop %v690
    %v695 = vpack.c.bf16 %v694, %v693
    %v697 = vunpack.c.l.b16 %v695
    %v698 = vunpack.c.h.b16 %v695
    %v699 = vpack.c.b16 %v697, %v697
    %v700 = vpack.c.b16 %v698, %v698
    %703 = vst [vmem:[%s8] sm:$0xf] %v699
    %704 = vst [vmem:[%s8 + $0x4] sm:$0xf] %v700
    // Predicated region
    $region42: #{actor_forward.2} parent=1 // pred_check
      _
    $region43: #{actor_forward.2} parent=1 // pred_check_branch
      %706 = sbr.rel (0) target = $region45
    $region44: #{actor_forward.2} parent=1 // pred_region
      _
    $region45: #{actor_forward.2} parent=1 // pred_fallthru
      _
    // Predicated region
    $region46: #{actor_forward.2} parent=1 // pred_check
      _
    $region47: #{actor_forward.2} parent=1 // pred_check_branch
      %708 = sbr.rel (0) target = $region49
    $region48: #{actor_forward.2} parent=1 // pred_region
      _
    $region49: #{actor_forward.2} parent=1 // pred_fallthru
      _
    %709 = vsyncpa [#allocation8], 1
    %710 = vsyncpa [#allocation10], 1

</llo_original>
